<compile_context>
chip_gen: v6e
topology: v6e:2x2x1
jax: 0.10.0
libtpu: 0.0.40
codegen_flags: <defaults>
</compile_context>

<pallas_src>
import math

import jax
import jax.numpy as jnp
from jax.experimental import pallas as pl
from jax.experimental.pallas import tpu as pltpu

CALEC_DIM = 1024
ROBERTA_DIM = 768
NUM_LABELS = 4
MARGIN = 0.5


def _round_up(x, m):
    return (x + m - 1) // m * m


def _sublane_unit(*dtypes):
    # 8 sublanes for 4-byte dtypes, 16 for 2-byte (bf16), 32 for 1-byte.
    return max(8 * max(1, 4 // jnp.dtype(d).itemsize) for d in dtypes)


def _pick_block_rows(batch, unit, max_rows):
    """Largest multiple of `unit` <= max_rows that divides batch (avoids padding);
    otherwise min(max_rows, batch rounded up to `unit`)."""
    best = None
    t = unit
    limit = min(max_rows, batch)
    while t <= limit:
        if batch % t == 0:
            best = t
        t += unit
    if best is None:
        best = _round_up(min(max_rows, _round_up(batch, unit)), unit)
    return best


def _logits_kernel(calec_ref, rob_ref, wc_ref, wr_ref, b_ref, logits_ref):
    # calec: (TB, 1024) native dtype, rob: (TB, 768), wc/wr: (1, D) f32 resident,
    # b: SMEM (1,) f32, logits out: (TB, 1) f32.
    x = calec_ref[...].astype(jnp.float32)          # upcast in-register
    y = rob_ref[...].astype(jnp.float32)
    logits_ref[...] = (
        jnp.sum(x * wc_ref[...], axis=-1, keepdims=True)
        + jnp.sum(y * wr_ref[...], axis=-1, keepdims=True)
        + b_ref[0])


def _logits_loss_kernel(calec_ref, rob_ref, wc_ref, wr_ref, label_ref, group_ref,
                        b_ref, nrow_ref, logits_ref, loss_ref):
    # Fused classifier matvec + pairwise hinge loss (per-tile partial).
    x = calec_ref[...].astype(jnp.float32)
    y = rob_ref[...].astype(jnp.float32)
    row = (jnp.sum(x * wc_ref[...], axis=-1, keepdims=True)
           + jnp.sum(y * wr_ref[...], axis=-1, keepdims=True)
           + b_ref[0])                              # (TB, 1) f32 per-row logits
    logits_ref[...] = row

    # right_answer per row = logit at its group's one-hot label position.
    contrib = row * label_ref[...]                  # nonzero only at label rows
    right = jnp.dot(group_ref[...], contrib,
                    preferred_element_type=jnp.float32)   # (TB, 1), group-broadcast
    hinge = jnp.maximum(MARGIN + row - right, 0.0)

    # Mask padded rows (rows >= true batch size) so padding never leaks into loss.
    tb = row.shape[0]
    gid = jax.lax.broadcasted_iota(jnp.int32, (tb, 1), 0) + pl.program_id(0) * tb
    hinge = jnp.where(gid < nrow_ref[0], hinge, 0.0)
    loss_ref[...] = jnp.broadcast_to(jnp.sum(hinge), loss_ref.shape)


def dual_ensemble_pairwise_forward(calec_out, align_loss, roberta_pooled, w, b,
                                   label=None, num_labels=NUM_LABELS,
                                   block_rows=512):
    """Mirrors dual_ensemble_model_pairwise.forward after the two submodel calls.

    calec_out       : (B, 1024) CALeC backbone output (native dtype, e.g. bf16)
    roberta_pooled  : (B, 768)  roberta_encoder_output[1] (pooler output)
    w, b            : nn.Linear(1024+768, 1) weight (1, 1792) and bias (1,)
    label           : optional flat (B,) / (N, num_labels) one-hot labels
    """
    calec_out = jnp.asarray(calec_out)
    roberta_pooled = jnp.asarray(roberta_pooled)
    B, dc = calec_out.shape
    dr = roberta_pooled.shape[-1]
    assert B % num_labels == 0, "batch must be a multiple of num_labels"
    N = B // num_labels

    unit = math.lcm(_sublane_unit(calec_out.dtype, roberta_pooled.dtype), num_labels)
    TB = _pick_block_rows(B, unit, block_rows)
    B_pad = _round_up(B, TB)
    num_tiles = B_pad // TB

    if B_pad != B:
        pad = ((0, B_pad - B), (0, 0))
        calec_out = jnp.pad(calec_out, pad)
        roberta_pooled = jnp.pad(roberta_pooled, pad)

    # Small classifier params in f32 (tiny); big activations stay native dtype.
    w = jnp.asarray(w, jnp.float32)
    w_c = w[:, :dc].reshape(1, dc)
    w_r = w[:, dc:dc + dr].reshape(1, dr)
    b_s = jnp.asarray(b, jnp.float32).reshape(1)

    grid = (num_tiles,)
    calec_spec = pl.BlockSpec((TB, dc), lambda i: (i, 0))
    rob_spec = pl.BlockSpec((TB, dr), lambda i: (i, 0))
    # Constant index_map -> weights DMA'd once, resident across all grid steps.
    wc_spec = pl.BlockSpec((1, dc), lambda i: (0, 0))
    wr_spec = pl.BlockSpec((1, dr), lambda i: (0, 0))
    smem = pl.BlockSpec(memory_space=pltpu.MemorySpace.SMEM)
    logits_spec = pl.BlockSpec((TB, 1), lambda i: (i, 0))

    act_bytes = (calec_out.dtype.itemsize * B_pad * dc
                 + roberta_pooled.dtype.itemsize * B_pad * dr)
    flops = 2 * B_pad * (dc + dr)
    cparams = pltpu.CompilerParams(
        dimension_semantics=("parallel",),
        vmem_limit_bytes=32 * 1024 * 1024)

    if label is None:
        logits_pad = pl.pallas_call(
            _logits_kernel,
            grid=grid,
            in_specs=[calec_spec, rob_spec, wc_spec, wr_spec, smem],
            out_specs=logits_spec,
            out_shape=jax.ShapeDtypeStruct((B_pad, 1), jnp.float32),
            compiler_params=cparams,
            cost_estimate=pl.CostEstimate(flops=flops, transcendentals=0,
                                          bytes_accessed=act_bytes + 4 * B_pad),
        )(calec_out, roberta_pooled, w_c, w_r, b_s)
        reshaped_logits = logits_pad[:B].reshape(N, num_labels)
        return None, align_loss, reshaped_logits

    lbl = jnp.asarray(label, jnp.float32).reshape(B)
    if B_pad != B:
        lbl = jnp.pad(lbl, (0, B_pad - B))
    lbl = lbl.reshape(B_pad, 1)

    # Group-membership matrix: S[r, c] = 1 iff rows r and c belong to the same
    # question (consecutive groups of num_labels rows). Tiny, VMEM-resident.
    gidx = jnp.arange(TB, dtype=jnp.int32) // num_labels
    group_mat = (gidx[:, None] == gidx[None, :]).astype(jnp.float32)
    nrow = jnp.array([B], dtype=jnp.int32)

    label_spec = pl.BlockSpec((TB, 1), lambda i: (i, 0))
    group_spec = pl.BlockSpec((TB, TB), lambda i: (0, 0))       # resident
    loss_spec = pl.BlockSpec((1, 1, 128), lambda i: (i, 0, 0))  # per-tile partials

    logits_pad, loss_parts = pl.pallas_call(
        _logits_loss_kernel,
        grid=grid,
        in_specs=[calec_spec, rob_spec, wc_spec, wr_spec, label_spec,
                  group_spec, smem, smem],
        out_specs=(logits_spec, loss_spec),
        out_shape=(jax.ShapeDtypeStruct((B_pad, 1), jnp.float32),
                   jax.ShapeDtypeStruct((num_tiles, 1, 128), jnp.float32)),
        compiler_params=cparams,
        cost_estimate=pl.CostEstimate(
            flops=flops + 2 * num_tiles * TB * TB + 6 * B_pad,
            transcendentals=0,
            bytes_accessed=act_bytes + 4 * (2 * B_pad + TB * TB + 128 * num_tiles)),
    )(calec_out, roberta_pooled, w_c, w_r, lbl, group_mat, b_s, nrow)

    reshaped_logits = logits_pad[:B].reshape(N, num_labels)
    loss = jnp.sum(loss_parts[:, 0, 0])
    return loss, align_loss, reshaped_logits


def _reference(calec, rob, w, b, label, num_labels=NUM_LABELS):
    # Pure-JAX mirror of the PyTorch forward (f32 math, no MXU precision quirks).
    ens = jnp.concatenate([calec.astype(jnp.float32), rob.astype(jnp.float32)],
                          axis=-1)
    logits = jnp.sum(ens * w.astype(jnp.float32), axis=-1, keepdims=True) + b
    reshaped = logits.reshape(-1, num_labels)
    if label is None:
        return None, reshaped
    lbl2 = jnp.asarray(label, jnp.float32).reshape(-1, num_labels)
    right = jnp.sum(reshaped * lbl2, axis=-1, keepdims=True)
    hinge = jnp.maximum(MARGIN + reshaped - right, 0.0)
    return jnp.sum(hinge), reshaped


if __name__ == "__main__":
    key = jax.random.PRNGKey(0)
    k1, k2, k3, k4, k5, k6 = jax.random.split(key, 6)

    # Stand-ins for external submodel outputs (native bf16, as backbones emit).
    w = 0.02 * jax.random.normal(k3, (1, CALEC_DIM + ROBERTA_DIM), dtype=jnp.float32)
    b = 0.01 * jax.random.normal(k4, (1,), dtype=jnp.float32)
    align_loss = jnp.float32(0.123)

    # --- Case 1: N=2 questions (B=8 rows), single tile, training + inference.
    B1 = 2 * NUM_LABELS
    calec1 = jax.random.normal(k1, (B1, CALEC_DIM), jnp.float32).astype(jnp.bfloat16)
    rob1 = jax.random.normal(k2, (B1, ROBERTA_DIM), jnp.float32).astype(jnp.bfloat16)
    lab1 = jax.nn.one_hot(jnp.array([1, 3]), NUM_LABELS, dtype=jnp.float32).reshape(B1)

    loss1, aloss1, logits1 = dual_ensemble_pairwise_forward(
        calec1, align_loss, rob1, w, b, label=lab1)
    jax.block_until_ready(logits1)
    loss1_ref, logits1_ref = _reference(calec1, rob1, w, b, lab1)
    assert jnp.allclose(logits1, logits1_ref, atol=1e-4, rtol=1e-4)
    assert jnp.allclose(loss1, loss1_ref, atol=1e-4, rtol=1e-4)
    assert jnp.allclose(aloss1, align_loss)

    loss_n, _, logits_n = dual_ensemble_pairwise_forward(
        calec1, align_loss, rob1, w, b, label=None)
    jax.block_until_ready(logits_n)
    assert loss_n is None
    assert jnp.allclose(logits_n, logits1_ref, atol=1e-4, rtol=1e-4)

    # --- Case 2: N=5 (B=20), small block_rows -> multi-tile grid + padded tail,
    # exercising resident weights, per-tile loss partials and row masking.
    B2 = 5 * NUM_LABELS
    calec2 = jax.random.normal(k5, (B2, CALEC_DIM), jnp.float32).astype(jnp.bfloat16)
    rob2 = jax.random.normal(k6, (B2, ROBERTA_DIM), jnp.float32).astype(jnp.bfloat16)
    lab2 = jax.nn.one_hot(jnp.array([0, 2, 3, 1, 2]), NUM_LABELS,
                          dtype=jnp.float32).reshape(B2)

    loss2, _, logits2 = dual_ensemble_pairwise_forward(
        calec2, align_loss, rob2, w, b, label=lab2, block_rows=16)
    jax.block_until_ready(logits2)
    loss2_ref, logits2_ref = _reference(calec2, rob2, w, b, lab2)
    assert jnp.allclose(logits2, logits2_ref, atol=1e-4, rtol=1e-4)
    assert jnp.allclose(loss2, loss2_ref, atol=1e-4, rtol=1e-4)

    print("KERNEL_OK")
</pallas_src>

<mosaic_0001>
module attributes {stable_mosaic.version = 11 : i64} {
  func.func @_logits_loss_kernel(%arg0: i32, %arg1: memref<16x1024xbf16, #tpu.memory_space<vmem>>, %arg2: memref<16x768xbf16, #tpu.memory_space<vmem>>, %arg3: memref<1x1024xf32, #tpu.memory_space<vmem>>, %arg4: memref<1x768xf32, #tpu.memory_space<vmem>>, %arg5: memref<16x1xf32, #tpu.memory_space<vmem>>, %arg6: memref<16x16xf32, #tpu.memory_space<vmem>>, %arg7: memref<1xf32, #tpu.memory_space<smem>>, %arg8: memref<1xi32, #tpu.memory_space<smem>>, %arg9: memref<16x1xf32, #tpu.memory_space<vmem>>, %arg10: memref<1x1x128xf32, #tpu.memory_space<vmem>>) attributes {dimension_semantics = [#tpu.dimension_semantics<parallel>], iteration_bounds = array<i64: 1>, scalar_prefetch = 0 : i64, scratch_operands = 0 : i64, tpu.core_type = #tpu.core_type<tc>, window_params = [{transform_indices = @transform_0, window_bounds = array<i64: 16, 1024>}, {transform_indices = @transform_1, window_bounds = array<i64: 16, 768>}, {pipeline_mode = #tpu.pipeline_mode<synchronous>, transform_indices = @transform_2, window_bounds = array<i64: 1, 1024>}, {pipeline_mode = #tpu.pipeline_mode<synchronous>, transform_indices = @transform_3, window_bounds = array<i64: 1, 768>}, {transform_indices = @transform_4, window_bounds = array<i64: 16, 1>}, {pipeline_mode = #tpu.pipeline_mode<synchronous>, transform_indices = @transform_5, window_bounds = array<i64: 16, 16>}, {transform_indices = @transform_6, window_bounds = array<i64: 1>}, {transform_indices = @transform_7, window_bounds = array<i64: 1>}, {transform_indices = @transform_8, window_bounds = array<i64: 16, 1>}, {transform_indices = @transform_9, window_bounds = array<i64: 1, 1, 128>}]} {
    %c0 = arith.constant 0 : index
    %c0_0 = arith.constant 0 : index
    %0 = vector.load %arg1[%c0, %c0_0] : memref<16x1024xbf16, #tpu.memory_space<vmem>>, vector<16x1024xbf16>
    %1 = arith.extf %0 : vector<16x1024xbf16> to vector<16x1024xf32>
    %c0_1 = arith.constant 0 : index
    %c0_2 = arith.constant 0 : index
    %2 = vector.load %arg2[%c0_1, %c0_2] : memref<16x768xbf16, #tpu.memory_space<vmem>>, vector<16x768xbf16>
    %3 = arith.extf %2 : vector<16x768xbf16> to vector<16x768xf32>
    %c0_3 = arith.constant 0 : index
    %c0_4 = arith.constant 0 : index
    %4 = vector.load %arg3[%c0_3, %c0_4] : memref<1x1024xf32, #tpu.memory_space<vmem>>, vector<1x1024xf32>
    %5 = vector.broadcast %4 : vector<1x1024xf32> to vector<16x1024xf32>
    %6 = arith.mulf %1, %5 : vector<16x1024xf32>
    %cst = arith.constant dense<0.000000e+00> : vector<16xf32>
    %7 = vector.multi_reduction <add>, %6, %cst [1] : vector<16x1024xf32> to vector<16xf32>
    %8 = vector.shape_cast %7 : vector<16xf32> to vector<16x1xf32>
    %c0_5 = arith.constant 0 : index
    %c0_6 = arith.constant 0 : index
    %9 = vector.load %arg4[%c0_5, %c0_6] : memref<1x768xf32, #tpu.memory_space<vmem>>, vector<1x768xf32>
    %10 = vector.broadcast %9 : vector<1x768xf32> to vector<16x768xf32>
    %11 = arith.mulf %3, %10 : vector<16x768xf32>
    %cst_7 = arith.constant dense<0.000000e+00> : vector<16xf32>
    %12 = vector.multi_reduction <add>, %11, %cst_7 [1] : vector<16x768xf32> to vector<16xf32>
    %13 = vector.shape_cast %12 : vector<16xf32> to vector<16x1xf32>
    %14 = arith.addf %8, %13 : vector<16x1xf32>
    %c0_8 = arith.constant 0 : index
    %15 = memref.load %arg7[%c0_8] : memref<1xf32, #tpu.memory_space<smem>>
    %16 = vector.broadcast %15 : f32 to vector<16x1xf32>
    %17 = arith.addf %14, %16 : vector<16x1xf32>
    %c0_9 = arith.constant 0 : index
    %c0_10 = arith.constant 0 : index
    %18 = vector.load %arg9[%c0_9, %c0_10] : memref<16x1xf32, #tpu.memory_space<vmem>>, vector<16x1xf32>
    tpu.vector_store %arg9[%c0_9, %c0_10], %17 {strides = array<i32>} : memref<16x1xf32, #tpu.memory_space<vmem>>, vector<16x1xf32>,
    %c0_11 = arith.constant 0 : index
    %c0_12 = arith.constant 0 : index
    %19 = vector.load %arg5[%c0_11, %c0_12] : memref<16x1xf32, #tpu.memory_space<vmem>>, vector<16x1xf32>
    %20 = arith.mulf %17, %19 : vector<16x1xf32>
    %c0_13 = arith.constant 0 : index
    %c0_14 = arith.constant 0 : index
    %21 = vector.load %arg6[%c0_13, %c0_14] : memref<16x16xf32, #tpu.memory_space<vmem>>, vector<16x16xf32>
    %cst_15 = arith.constant dense<0.000000e+00> : vector<16x1xf32>
    %22 = tpu.matmul %21, %20, %cst_15 {dimension_numbers = #tpu.dot_dimension_numbers<[1], [0], [0], [1], [0, 0, 1, 1], [], []>} : vector<16x16xf32>, vector<16x1xf32>, vector<16x1xf32> -> vector<16x1xf32>
    %cst_16 = arith.constant 5.000000e-01 : f32
    %23 = vector.broadcast %cst_16 : f32 to vector<16x1xf32>
    %24 = arith.addf %23, %17 : vector<16x1xf32>
    %25 = arith.subf %24, %22 : vector<16x1xf32>
    %cst_17 = arith.constant 0.000000e+00 : f32
    %26 = vector.broadcast %cst_17 : f32 to vector<16x1xf32>
    %27 = arith.maximumf %25, %26 : vector<16x1xf32>
    %28 = tpu.iota {dimensions = array<i32: 0>} : vector<16x1xi32>
    %c16_i32 = arith.constant 16 : i32
    %29 = arith.muli %arg0, %c16_i32 : i32
    %30 = vector.broadcast %29 : i32 to vector<16x1xi32>
    %31 = arith.addi %28, %30 : vector<16x1xi32>
    %c0_18 = arith.constant 0 : index
    %32 = memref.load %arg8[%c0_18] : memref<1xi32, #tpu.memory_space<smem>>
    %33 = vector.broadcast %32 : i32 to vector<16x1xi32>
    %34 = arith.cmpi slt, %31, %33 : vector<16x1xi32>
    %cst_19 = arith.constant 0.000000e+00 : f32
    %35 = vector.broadcast %cst_19 : f32 to vector<16x1xf32>
    %36 = arith.select %34, %27, %35 : vector<16x1xi1>, vector<16x1xf32>
    %37 = vector.shape_cast %36 : vector<16x1xf32> to vector<1x16x1xf32>
    %cst_20 = arith.constant dense<0.000000e+00> : vector<1xf32>
    %38 = vector.multi_reduction <add>, %37, %cst_20 [1, 2] : vector<1x16x1xf32> to vector<1xf32>
    %39 = vector.shape_cast %38 : vector<1xf32> to vector<1x1x1xf32>
    %40 = vector.extract %39[0, 0, 0] : f32 from vector<1x1x1xf32>
    %41 = vector.broadcast %40 : f32 to vector<1x1x128xf32>
    %c0_21 = arith.constant 0 : index
    %c0_22 = arith.constant 0 : index
    %c0_23 = arith.constant 0 : index
    %42 = vector.load %arg10[%c0_21, %c0_22, %c0_23] : memref<1x1x128xf32, #tpu.memory_space<vmem>>, vector<1x1x128xf32>
    tpu.vector_store %arg10[%c0_21, %c0_22, %c0_23], %41 {strides = array<i32>} : memref<1x1x128xf32, #tpu.memory_space<vmem>>, vector<1x1x128xf32>,
    return
  }
  func.func @transform_0(%arg0: i32) -> (i32, i32) {
    %c0_i32 = arith.constant 0 : i32
    %c0_i32_0 = arith.constant 0 : i32
    return %arg0, %c0_i32 : i32, i32
  }
  func.func @transform_1(%arg0: i32) -> (i32, i32) {
    %c0_i32 = arith.constant 0 : i32
    %c0_i32_0 = arith.constant 0 : i32
    return %arg0, %c0_i32 : i32, i32
  }
  func.func @transform_2(%arg0: i32) -> (i32, i32) {
    %c0_i32 = arith.constant 0 : i32
    %c0_i32_0 = arith.constant 0 : i32
    %c0_i32_1 = arith.constant 0 : i32
    return %c0_i32, %c0_i32_0 : i32, i32
  }
  func.func @transform_3(%arg0: i32) -> (i32, i32) {
    %c0_i32 = arith.constant 0 : i32
    %c0_i32_0 = arith.constant 0 : i32
    %c0_i32_1 = arith.constant 0 : i32
    return %c0_i32, %c0_i32_0 : i32, i32
  }
  func.func @transform_4(%arg0: i32) -> (i32, i32) {
    %c0_i32 = arith.constant 0 : i32
    %c0_i32_0 = arith.constant 0 : i32
    return %arg0, %c0_i32 : i32, i32
  }
  func.func @transform_5(%arg0: i32) -> (i32, i32) {
    %c0_i32 = arith.constant 0 : i32
    %c0_i32_0 = arith.constant 0 : i32
    %c0_i32_1 = arith.constant 0 : i32
    return %c0_i32, %c0_i32_0 : i32, i32
  }
  func.func @transform_6(%arg0: i32) -> i32 {
    %c0_i32 = arith.constant 0 : i32
    %c0_i32_0 = arith.constant 0 : i32
    return %c0_i32 : i32
  }
  func.func @transform_7(%arg0: i32) -> i32 {
    %c0_i32 = arith.constant 0 : i32
    %c0_i32_0 = arith.constant 0 : i32
    return %c0_i32 : i32
  }
  func.func @transform_8(%arg0: i32) -> (i32, i32) {
    %c0_i32 = arith.constant 0 : i32
    %c0_i32_0 = arith.constant 0 : i32
    return %arg0, %c0_i32 : i32, i32
  }
  func.func @transform_9(%arg0: i32) -> (i32, i32, i32) {
    %c0_i32 = arith.constant 0 : i32
    %c0_i32_0 = arith.constant 0 : i32
    %c0_i32_1 = arith.constant 0 : i32
    return %arg0, %c0_i32, %c0_i32_0 : i32, i32, i32
  }
}

</mosaic_0001>

<llo_original>
// kernel: tpu_custom_call.1
$region0: #{tpu_custom_call.1}
  #allocation0 [shape = 'u32[]', space=smem, size = 0x4, offset = 0x4, fixed_abs, tag = 'smem constant byte address 0x4 - core index']
  #allocation1 [shape = 'u32[144,128]{1,0:T(1,128)}', space=vmem, size = 0x12000, scoped, tag = 'internal scratch']
  #allocation2 [shape = 'f32[1]{0:T(128)S(6)}', space=smem, size = 0x200, scoped, tag = 'scoped memory for tpu_custom_call.1']
  #allocation3 [shape = 's32[1]{0:T(128)S(6)}', space=smem, size = 0x200, scoped, tag = 'scoped memory for tpu_custom_call.1']
  %s0 = inlined_call_operand.hbm [shape: bf16[16,1024], index: 0, kind: input, shape index: {}]
  %s1 = inlined_call_operand.hbm [shape: bf16[16,768], index: 1, kind: input, shape index: {}]
  %s2 = inlined_call_operand.vmem [shape: f32[1,1024], index: 2, kind: input, shape index: {}]
  %s3 = inlined_call_operand.vmem [shape: f32[1,768], index: 3, kind: input, shape index: {}]
  %s4 = inlined_call_operand.vmem [shape: f32[16,1], index: 4, kind: input, shape index: {}]
  %s5 = inlined_call_operand.vmem [shape: f32[16,16], index: 5, kind: input, shape index: {}]
  %s6 = inlined_call_operand.<no memory space> [shape: f32[1], index: 6, kind: input, shape index: {}]
  %s7 = inlined_call_operand.<no memory space> [shape: s32[1], index: 7, kind: input, shape index: {}]
  %s8 = inlined_call_operand.vmem [shape: f32[16,1], index: 8, kind: output, shape index: {0}]
  %s9 = inlined_call_operand.hbm [shape: f32[1,1,128], index: 9, kind: output, shape index: {1}]
  %10 = xla_tuple %s8, %s9
  %s11 = sld [smem:[#allocation0]]
  $region58: #{tpu_custom_call.1} parent=0
    _
  %s13 = ssub.s32 1, %s11
  %s14 = scalar_select 0, %s13, %s11
  %15 = sst [smem:[#allocation2]] %s6
  %16 = sst [smem:[#allocation3]] %s7
  $region1: #{tpu_custom_call.1} parent=0
    #allocation4 [shape = 'u8[32768]{0}', space=vmem, size = 0x8000, scoped, tag = 'input window, operand 0, single buffered']
    #allocation5 [shape = 's32[1]{0}', space=sflag, size = 0x4, scoped, tag = 'scoped memory for tpu_custom_call.1']
    #allocation6 [shape = 's32[1]{0}', space=sflag, size = 0x4, scoped, tag = 'scoped memory for tpu_custom_call.1']
    #allocation7 [shape = 'u8[24576]{0}', space=vmem, size = 0x6000, scoped, tag = 'input window, operand 1, single buffered']
    #allocation8 [shape = 's32[1]{0}', space=sflag, size = 0x4, scoped, tag = 'scoped memory for tpu_custom_call.1']
    #allocation9 [shape = 'u8[512]{0}', space=vmem, size = 0x400, scoped, tag = 'output window, operand 1, single buffered']
    %17 = vsyncpa [#allocation5], 0
    %18 = vsyncpa [#allocation8], 0
    %19 = vsyncpa [#allocation6], 0
    // Predicated region
    $region2: #{tpu_custom_call.1} parent=1 // pred_check
      _
    $region3: #{tpu_custom_call.1} parent=1 // pred_check_branch
      %21 = sbr.rel (0) target = $region5
    $region4: #{tpu_custom_call.1} parent=1 // pred_region
      %s23 = ssub.s32 1024, 1024
      %24 = vsyncadd [#allocation5], %s23
      %s25 = sshll.u32 [#allocation4], 4
      %s26 = int_to_ptr.vmem [resolvable:$true] %s25
      %31 = dma.hbm_to_vmem [thread:$0]  %s0, 1024, %s26, [#allocation5], 512, 512, 32
    $region5: #{tpu_custom_call.1} parent=1 // pred_fallthru
      _
    // Predicated region
    $region6: #{tpu_custom_call.1} parent=1 // pred_check
      _
    $region7: #{tpu_custom_call.1} parent=1 // pred_check_branch
      %33 = sbr.rel (0) target = $region9
    $region8: #{tpu_custom_call.1} parent=1 // pred_region
      %s35 = ssub.s32 768, 768
      %36 = vsyncadd [#allocation8], %s35
      %s37 = sshll.u32 [#allocation7], 4
      %s38 = int_to_ptr.vmem [resolvable:$true] %s37
      %43 = dma.hbm_to_vmem [thread:$0]  %s1, 768, %s38, [#allocation8], 384, 384, 24
    $region9: #{tpu_custom_call.1} parent=1 // pred_fallthru
      _
    // Predicated region
    $region10: #{tpu_custom_call.1} parent=1 // pred_check
      _
    $region11: #{tpu_custom_call.1} parent=1 // pred_check_branch
      %45 = sbr.rel (0) target = $region13
    $region12: #{tpu_custom_call.1} parent=1 // pred_region
      _
    $region13: #{tpu_custom_call.1} parent=1 // pred_fallthru
      _
    // Predicated region
    $region14: #{tpu_custom_call.1} parent=1 // pred_check
      _
    $region15: #{tpu_custom_call.1} parent=1 // pred_check_branch
      %47 = sbr.rel (0) target = $region17
    $region16: #{tpu_custom_call.1} parent=1 // pred_region
      _
    $region17: #{tpu_custom_call.1} parent=1 // pred_fallthru
      _
    // Predicated region
    $region18: #{tpu_custom_call.1} parent=1 // pred_check
      _
    $region19: #{tpu_custom_call.1} parent=1 // pred_check_branch
      %49 = sbr.rel (0) target = $region21
    $region20: #{tpu_custom_call.1} parent=1 // pred_region
      _
    $region21: #{tpu_custom_call.1} parent=1 // pred_fallthru
      _
    // Predicated region
    $region22: #{tpu_custom_call.1} parent=1 // pred_check
      _
    $region23: #{tpu_custom_call.1} parent=1 // pred_check_branch
      %51 = sbr.rel (0) target = $region25
    $region24: #{tpu_custom_call.1} parent=1 // pred_region
      _
    $region25: #{tpu_custom_call.1} parent=1 // pred_fallthru
      _
    // Predicated region
    $region26: #{tpu_custom_call.1} parent=1 // pred_check
      _
    $region27: #{tpu_custom_call.1} parent=1 // pred_check_branch
      %53 = sbr.rel (0) target = $region29
    $region28: #{tpu_custom_call.1} parent=1 // pred_region
      _
    $region29: #{tpu_custom_call.1} parent=1 // pred_fallthru
      _
    // Predicated region
    $region30: #{tpu_custom_call.1} parent=1 // pred_check
      _
    $region31: #{tpu_custom_call.1} parent=1 // pred_check_branch
      %55 = sbr.rel (0) target = $region33
    $region32: #{tpu_custom_call.1} parent=1 // pred_region
      _
    $region33: #{tpu_custom_call.1} parent=1 // pred_fallthru
      _
    // Predicated region
    $region34: #{tpu_custom_call.1} parent=1 // pred_check
      _
    $region35: #{tpu_custom_call.1} parent=1 // pred_check_branch
      %57 = sbr.rel (0) target = $region37
    $region36: #{tpu_custom_call.1} parent=1 // pred_region
      %58 = dma.done [#allocation5], 1024
    $region37: #{tpu_custom_call.1} parent=1 // pred_fallthru
      _
    // Predicated region
    $region38: #{tpu_custom_call.1} parent=1 // pred_check
      _
    $region39: #{tpu_custom_call.1} parent=1 // pred_check_branch
      %60 = sbr.rel (0) target = $region41
    $region40: #{tpu_custom_call.1} parent=1 // pred_region
      %61 = dma.done [#allocation8], 768
    $region41: #{tpu_custom_call.1} parent=1 // pred_fallthru
      _
    %v62 = vld [vmem:[#allocation4] sm:$0xff]
    %v63 = vld [vmem:[#allocation4 + $0x8] sm:$0xff]
    %v64 = vld [vmem:[#allocation4 + $0x10] sm:$0xff]
    %v65 = vld [vmem:[#allocation4 + $0x18] sm:$0xff]
    %v66 = vld [vmem:[#allocation4 + $0x20] sm:$0xff]
    %v67 = vld [vmem:[#allocation4 + $0x28] sm:$0xff]
    %v68 = vld [vmem:[#allocation4 + $0x30] sm:$0xff]
    %v69 = vld [vmem:[#allocation4 + $0x38] sm:$0xff]
    %v70 = vunpack.c.l.bf16 %v62
    %v71 = vunpack.c.h.bf16 %v62
    %v72 = vunpack.c.l.bf16 %v63
    %v73 = vunpack.c.h.bf16 %v63
    %v74 = vunpack.c.l.bf16 %v64
    %v75 = vunpack.c.h.bf16 %v64
    %v76 = vunpack.c.l.bf16 %v65
    %v77 = vunpack.c.h.bf16 %v65
    %v78 = vunpack.c.l.bf16 %v66
    %v79 = vunpack.c.h.bf16 %v66
    %v80 = vunpack.c.l.bf16 %v67
    %v81 = vunpack.c.h.bf16 %v67
    %v82 = vunpack.c.l.bf16 %v68
    %v83 = vunpack.c.h.bf16 %v68
    %v84 = vunpack.c.l.bf16 %v69
    %v85 = vunpack.c.h.bf16 %v69
    %v86 = vld [vmem:[#allocation7] sm:$0xff]
    %v87 = vld [vmem:[#allocation7 + $0x8] sm:$0xff]
    %v88 = vld [vmem:[#allocation7 + $0x10] sm:$0xff]
    %v89 = vld [vmem:[#allocation7 + $0x18] sm:$0xff]
    %v90 = vld [vmem:[#allocation7 + $0x20] sm:$0xff]
    %v91 = vld [vmem:[#allocation7 + $0x28] sm:$0xff]
    %v92 = vunpack.c.l.bf16 %v86
    %v93 = vunpack.c.h.bf16 %v86
    %v94 = vunpack.c.l.bf16 %v87
    %v95 = vunpack.c.h.bf16 %v87
    %v96 = vunpack.c.l.bf16 %v88
    %v97 = vunpack.c.h.bf16 %v88
    %v98 = vunpack.c.l.bf16 %v89
    %v99 = vunpack.c.h.bf16 %v89
    %v100 = vunpack.c.l.bf16 %v90
    %v101 = vunpack.c.h.bf16 %v90
    %v102 = vunpack.c.l.bf16 %v91
    %v103 = vunpack.c.h.bf16 %v91
    %v104 = vld [vmem:[%s2] sm:$0xff]
    %v106 = vlaneseq
    %v107 = vshrl.u32 %v106, 7
    %v108 = vsub.s32 0, %v107
    %v109 = vrot.slane %v104, %v108
    %v110 = vlaneseq
    %v111 = vshrl.u32 %v110, 7
    %v112 = vsub.s32 1, %v111
    %v113 = vrot.slane %v104, %v112
    %v114 = vlaneseq
    %v115 = vshrl.u32 %v114, 7
    %v116 = vsub.s32 2, %v115
    %v117 = vrot.slane %v104, %v116
    %v118 = vlaneseq
    %v119 = vshrl.u32 %v118, 7
    %v120 = vsub.s32 3, %v119
    %v121 = vrot.slane %v104, %v120
    %v122 = vlaneseq
    %v123 = vshrl.u32 %v122, 7
    %v124 = vsub.s32 4, %v123
    %v125 = vrot.slane %v104, %v124
    %v126 = vlaneseq
    %v127 = vshrl.u32 %v126, 7
    %v128 = vsub.s32 5, %v127
    %v129 = vrot.slane %v104, %v128
    %v130 = vlaneseq
    %v131 = vshrl.u32 %v130, 7
    %v132 = vsub.s32 6, %v131
    %v133 = vrot.slane %v104, %v132
    %v134 = vlaneseq
    %v135 = vshrl.u32 %v134, 7
    %v136 = vsub.s32 7, %v135
    %v137 = vrot.slane %v104, %v136
    %v146 = vmul.f32 %v70, %v109
    %v147 = vmul.f32 %v71, %v113
    %v148 = vmul.f32 %v72, %v117
    %v149 = vmul.f32 %v73, %v121
    %v150 = vmul.f32 %v74, %v125
    %v151 = vmul.f32 %v75, %v129
    %v152 = vmul.f32 %v76, %v133
    %v153 = vmul.f32 %v77, %v137
    %v154 = vmul.f32 %v78, %v109
    %v155 = vmul.f32 %v79, %v113
    %v156 = vmul.f32 %v80, %v117
    %v157 = vmul.f32 %v81, %v121
    %v158 = vmul.f32 %v82, %v125
    %v159 = vmul.f32 %v83, %v129
    %v160 = vmul.f32 %v84, %v133
    %v161 = vmul.f32 %v85, %v137
    %v162 = vadd.f32 %v146, %v147
    %v163 = vadd.f32 %v162, %v148
    %v164 = vadd.f32 %v163, %v149
    %v165 = vadd.f32 %v164, %v150
    %v166 = vadd.f32 %v165, %v151
    %v167 = vadd.f32 %v166, %v152
    %v168 = vadd.f32 %v167, %v153
    %169 = vadd.xlane.f32.xlu0 %v168
    %v170 = vpop.xlane.xlu0 %169
    %v171 = vadd.f32 %v154, %v155
    %v172 = vadd.f32 %v171, %v156
    %v173 = vadd.f32 %v172, %v157
    %v174 = vadd.f32 %v173, %v158
    %v175 = vadd.f32 %v174, %v159
    %v176 = vadd.f32 %v175, %v160
    %v177 = vadd.f32 %v176, %v161
    %178 = vadd.xlane.f32.xlu0 %v177
    %v179 = vpop.xlane.xlu0 %178
    %v180 = vld [vmem:[%s3] sm:$0x3f]
    %v182 = vlaneseq
    %v183 = vshrl.u32 %v182, 7
    %v184 = vsub.s32 0, %v183
    %v185 = vrot.slane %v180, %v184
    %v186 = vlaneseq
    %v187 = vshrl.u32 %v186, 7
    %v188 = vsub.s32 1, %v187
    %v189 = vrot.slane %v180, %v188
    %v190 = vlaneseq
    %v191 = vshrl.u32 %v190, 7
    %v192 = vsub.s32 2, %v191
    %v193 = vrot.slane %v180, %v192
    %v194 = vlaneseq
    %v195 = vshrl.u32 %v194, 7
    %v196 = vsub.s32 3, %v195
    %v197 = vrot.slane %v180, %v196
    %v198 = vlaneseq
    %v199 = vshrl.u32 %v198, 7
    %v200 = vsub.s32 4, %v199
    %v201 = vrot.slane %v180, %v200
    %v202 = vlaneseq
    %v203 = vshrl.u32 %v202, 7
    %v204 = vsub.s32 5, %v203
    %v205 = vrot.slane %v180, %v204
    %v212 = vmul.f32 %v92, %v185
    %v213 = vmul.f32 %v93, %v189
    %v214 = vmul.f32 %v94, %v193
    %v215 = vmul.f32 %v95, %v197
    %v216 = vmul.f32 %v96, %v201
    %v217 = vmul.f32 %v97, %v205
    %v218 = vmul.f32 %v98, %v185
    %v219 = vmul.f32 %v99, %v189
    %v220 = vmul.f32 %v100, %v193
    %v221 = vmul.f32 %v101, %v197
    %v222 = vmul.f32 %v102, %v201
    %v223 = vmul.f32 %v103, %v205
    %v224 = vadd.f32 %v212, %v213
    %v225 = vadd.f32 %v224, %v214
    %v226 = vadd.f32 %v225, %v215
    %v227 = vadd.f32 %v226, %v216
    %v228 = vadd.f32 %v227, %v217
    %229 = vadd.xlane.f32.xlu0 %v228
    %v230 = vpop.xlane.xlu0 %229
    %v231 = vadd.f32 %v218, %v219
    %v232 = vadd.f32 %v231, %v220
    %v233 = vadd.f32 %v232, %v221
    %v234 = vadd.f32 %v233, %v222
    %v235 = vadd.f32 %v234, %v223
    %236 = vadd.xlane.f32.xlu0 %v235
    %v237 = vpop.xlane.xlu0 %236
    %v238 = vadd.f32 %v170, %v230
    %v239 = vadd.f32 %v179, %v237
    %s240 = sld [smem:[#allocation2]]
    %v241 = vstv %s240
    %v242 = vadd.f32 %v238, %v241
    %v243 = vadd.f32 %v239, %v241
    %vm244 = vcmask 7168
    %245 = vst.msk [vmem:[%s8] sm:$0xff] %vm244, %v242
    %246 = vst.msk [vmem:[%s8 + $0x8] sm:$0xff] %vm244, %v243
    %v247 = vld [vmem:[%s4] sm:$0xff]
    %v248 = vld [vmem:[%s4 + $0x8] sm:$0xff]
    %v249 = vmul.f32 %v242, %v247
    %v250 = vmul.f32 %v243, %v248
    %v251 = vld [vmem:[%s5] sm:$0xff]
    %v252 = vld [vmem:[%s5 + $0x8] sm:$0xff]
    %vm253 = vcmask 130048
    %v255 = vsel %vm253, %v251, 0
    %v258 = vsel %vm253, %v252, 0
    %260 = vmatprep.subr.mxu0 0.0
    %261 = vmatpush1.msra.mxu0 0.0
    %262 = vmatprep.subr.mxu0 0.0
    %263 = vmatpush1.msra.mxu0 0.0
    %264 = vmatprep.subr.mxu0 0.0
    %265 = vmatpush1.msra.mxu0 0.0
    %266 = vmatprep.subr.mxu0 0.0
    %267 = vmatpush1.msra.mxu0 0.0
    %268 = vmatprep.subr.mxu0 0.0
    %269 = vmatpush1.msra.mxu0 0.0
    %270 = vmatprep.subr.mxu0 0.0
    %271 = vmatpush1.msra.mxu0 0.0
    %272 = vmatprep.subr.mxu0 0.0
    %273 = vmatpush1.msra.mxu0 0.0
    %274 = vmatprep.subr.mxu0 0.0
    %275 = vmatpush1.msra.mxu0 0.0
    %276 = vmatprep.subr.mxu0 0.0
    %277 = vmatpush1.msra.mxu0 0.0
    %278 = vmatprep.subr.mxu0 0.0
    %279 = vmatpush1.msra.mxu0 0.0
    %280 = vmatprep.subr.mxu0 0.0
    %281 = vmatpush1.msra.mxu0 0.0
    %282 = vmatprep.subr.mxu0 0.0
    %283 = vmatpush1.msra.mxu0 0.0
    %284 = vmatprep.subr.mxu0 0.0
    %285 = vmatpush1.msra.mxu0 0.0
    %286 = vmatprep.subr.mxu0 0.0
    %287 = vmatpush1.msra.mxu0 0.0
    %288 = vmatprep.subr.mxu0 0.0
    %289 = vmatpush1.msra.mxu0 %v250
    %290 = vmatprep.subr.mxu0 0.0
    %291 = vmatpush1.msra.mxu0 %v249
    %292 = vmatprep.subr.mxu0 0.0
    %293 = vmatpush2.msra.mxu0 0.0
    %294 = vmatprep.subr.mxu0 0.0
    %295 = vmatpush2.msra.mxu0 0.0
    %296 = vmatprep.subr.mxu0 0.0
    %297 = vmatpush2.msra.mxu0 0.0
    %298 = vmatprep.subr.mxu0 0.0
    %299 = vmatpush2.msra.mxu0 0.0
    %300 = vmatprep.subr.mxu0 0.0
    %301 = vmatpush2.msra.mxu0 0.0
    %302 = vmatprep.subr.mxu0 0.0
    %303 = vmatpush2.msra.mxu0 0.0
    %304 = vmatprep.subr.mxu0 0.0
    %305 = vmatpush2.msra.mxu0 0.0
    %306 = vmatprep.subr.mxu0 0.0
    %307 = vmatpush2.msra.mxu0 0.0
    %308 = vmatprep.subr.mxu0 0.0
    %309 = vmatpush2.msra.mxu0 0.0
    %310 = vmatprep.subr.mxu0 0.0
    %311 = vmatpush2.msra.mxu0 0.0
    %312 = vmatprep.subr.mxu0 0.0
    %313 = vmatpush2.msra.mxu0 0.0
    %314 = vmatprep.subr.mxu0 0.0
    %315 = vmatpush2.msra.mxu0 0.0
    %316 = vmatprep.subr.mxu0 0.0
    %317 = vmatpush2.msra.mxu0 0.0
    %318 = vmatprep.subr.mxu0 0.0
    %319 = vmatpush2.msra.mxu0 0.0
    %320 = vmatprep.subr.mxu0 0.0
    %321 = vmatpush2.msra.mxu0 0.0
    %322 = vmatprep.subr.mxu0 0.0
    %323 = vmatpush2.msra.mxu0 0.0
    %324 = vmatprep.mubr.f32.mxu0 0.0
    %325 = vmatmul.mubr.f32.gmra.mxu0 %v255
    %v326 = vpop.f32.mrf.mxu0
    %v327 = vadd.f32 0.0, %v326
    %v328 = vpop.f32.mrf.mxu0
    %329 = vmatprep.mubr.f32.mxu0 0.0
    %330 = vmatmul.mubr.f32.gmra.mxu0 %v258
    %v331 = vpop.f32.mrf.mxu0
    %v332 = vadd.f32 0.0, %v331
    %v333 = vpop.f32.mrf.mxu0
    %334 = vdwg.mxu0
    %v335 = vadd.f32 %v242, 0.5
    %v336 = vadd.f32 %v243, 0.5
    %v337 = vsub.f32 %v335, %v327
    %v338 = vsub.f32 %v336, %v332
    %v339 = vmax.f32 %v337, 0.0
    %v340 = vmax.f32 %v338, 0.0
    %v341 = vlaneseq
    %v342 = vshrl.u32 %v341, 7
    %v343 = vadd.s32 %v342, 8
    %s344 = smul.u32 0, 16
    %v345 = vstv %s344
    %v346 = vadd.s32 %v342, %v345
    %v347 = vadd.s32 %v343, %v345
    %s348 = sld [smem:[#allocation3]]
    %v349 = vstv %s348
    %vm350 = vcmp.lt.s32.totalorder %v346, %v349
    %vm351 = vcmp.lt.s32.totalorder %v347, %v349
    %v352 = vsel %vm350, %v339, 0.0
    %v353 = vsel %vm351, %v340, 0.0
    %v354 = vsel %vm244, %v352, 0.0
    %v355 = vsel %vm244, %v353, 0.0
    %v356 = vadd.f32 %v354, %v355
    %357 = vadd.xlane.f32.xlu0 %v356
    %v358 = vpop.xlane.xlu0 %357
    %v359 = vrot.slane %v358, 4
    %v360 = vadd.f32 %v358, %v359
    %v361 = vrot.slane %v360, 2
    %v362 = vadd.f32 %v360, %v361
    %v363 = vrot.slane %v362, 1
    %v364 = vadd.f32 %v362, %v363
    %s365 = vtos %v364
    %v366 = vstv %s365
    %367 = vst [vmem:[#allocation9] sm:$0x1] %v366
    // Predicated region
    $region42: #{tpu_custom_call.1} parent=1 // pred_check
      _
    $region43: #{tpu_custom_call.1} parent=1 // pred_check_branch
      %369 = sbr.rel (0) target = $region45
    $region44: #{tpu_custom_call.1} parent=1 // pred_region
      _
    $region45: #{tpu_custom_call.1} parent=1 // pred_fallthru
      _
    // Predicated region
    $region46: #{tpu_custom_call.1} parent=1 // pred_check
      _
    $region47: #{tpu_custom_call.1} parent=1 // pred_check_branch
      %371 = sbr.rel (0) target = $region49
    $region48: #{tpu_custom_call.1} parent=1 // pred_region
      %s373 = ssub.s32 16, 16
      %374 = vsyncadd [#allocation6], %s373
      %s376 = sshll.u32 [#allocation9], 4
      %s377 = int_to_ptr.vmem [resolvable:$true] %s376
      %379 = dma.vmem_to_hbm [thread:$0]  %s377, 16, %s9, [#allocation6]
    $region49: #{tpu_custom_call.1} parent=1 // pred_fallthru
      _
    // Predicated region
    $region50: #{tpu_custom_call.1} parent=1 // pred_check
      _
    $region51: #{tpu_custom_call.1} parent=1 // pred_check_branch
      %381 = sbr.rel (0) target = $region53
    $region52: #{tpu_custom_call.1} parent=1 // pred_region
      _
    $region53: #{tpu_custom_call.1} parent=1 // pred_fallthru
      _
    // Predicated region
    $region54: #{tpu_custom_call.1} parent=1 // pred_check
      _
    $region55: #{tpu_custom_call.1} parent=1 // pred_check_branch
      %383 = sbr.rel (0) target = $region57
    $region56: #{tpu_custom_call.1} parent=1 // pred_region
      %384 = dma.done [#allocation6], 16
    $region57: #{tpu_custom_call.1} parent=1 // pred_fallthru
      _
    %385 = vsyncpa [#allocation5], 1
    %386 = vsyncpa [#allocation8], 1
    %387 = vsyncpa [#allocation6], 1

</llo_original>
